<compile_context>
chip_gen: v7x
topology: tpu7x:2x2x1
jax: 0.10.0
libtpu: 0.0.40
codegen_flags: <defaults>
</compile_context>

<pallas_src>
import functools

import jax
import jax.numpy as jnp
from jax.experimental import pallas as pl
from jax.experimental.pallas import tpu as pltpu


def _yolo_v1_loss_kernel(pred_ref, tgt_ref, out_ref, *, S, B, C,
                         lambda_coord, lambda_noobj):
    # pred_ref / tgt_ref blocks: [NCH, TILE_G, 128]  (cells are lane-dense)
    f32 = jnp.float32

    def prow(c):                       # one channel -> dense [TILE_G, 128] tile
        return pred_ref[c].astype(f32)

    def trow(c):
        return tgt_ref[c].astype(f32)

    inv_S = 1.0 / float(S)

    # ----- target box 0: defines cell type and the IoU target box ------------
    tx, ty, tw, th, t_conf = (trow(c) for c in range(5))
    coord = t_conf > 0.0               # "object" cells
    noobj = t_conf == 0.0              # "no object" cells (incl. zero padding)

    t_x1 = tx * inv_S - 0.5 * tw
    t_y1 = ty * inv_S - 0.5 * th
    t_x2 = tx * inv_S + 0.5 * tw
    t_y2 = ty * inv_S + 0.5 * th
    area_t = (t_x2 - t_x1) * (t_y2 - t_y1)

    # ----- per-box pass: load each box's channels ONCE and reuse them for the
    #       no-object conf loss, the IoU, and the responsible-box selection ---
    p_boxes = []                       # (px, py, pw, ph, pc) per predicted box
    t_boxes = []                       # (tx, ty, tw, th) per target box
    ious = []
    noobj_cell = jnp.zeros_like(t_conf)
    for b in range(B):
        if b == 0:
            tb, tcb = (tx, ty, tw, th), t_conf
        else:
            tb = tuple(trow(5 * b + k) for k in range(4))
            tcb = trow(5 * b + 4)
        t_boxes.append(tb)

        px, py, pw, ph, pc = (prow(5 * b + k) for k in range(5))
        p_boxes.append((px, py, pw, ph, pc))

        d = pc - tcb
        noobj_cell = noobj_cell + d * d

        p_x1 = px * inv_S - 0.5 * pw
        p_y1 = py * inv_S - 0.5 * ph
        p_x2 = px * inv_S + 0.5 * pw
        p_y2 = py * inv_S + 0.5 * ph
        iw = jnp.maximum(jnp.minimum(p_x2, t_x2) - jnp.maximum(p_x1, t_x1), 0.0)
        ih = jnp.maximum(jnp.minimum(p_y2, t_y2) - jnp.maximum(p_y1, t_y1), 0.0)
        inter = iw * ih
        area_p = (p_x2 - p_x1) * (p_y2 - p_y1)
        # eps guards 0/0 on degenerate (all-zero / padded) cells; those cells
        # are masked out of the summed loss anyway.
        ious.append(inter / (area_p + area_t - inter + 1e-10))

    # ----- responsible-box selection (first-max tie-break, like torch.max) ---
    best_iou = ious[0]
    r_p = list(p_boxes[0])
    r_t = list(t_boxes[0])
    for b in range(1, B):
        better = ious[b] > best_iou
        best_iou = jnp.where(better, ious[b], best_iou)
        r_p = [jnp.where(better, p_boxes[b][k], r_p[k]) for k in range(5)]
        r_t = [jnp.where(better, t_boxes[b][k], r_t[k]) for k in range(4)]
    r_px, r_py, r_pw, r_ph, r_pc = r_p
    r_tx, r_ty, r_tw, r_th = r_t

    # ----- class loss: accumulate squared diffs over the C class channels ----
    # (plain VPU adds over lane-dense rows; no cross-lane reduction)
    class_cell = jnp.zeros_like(t_conf)
    for c in range(C):
        d = prow(5 * B + c) - trow(5 * B + c)
        class_cell = class_cell + d * d

    xy_cell = (r_px - r_tx) ** 2 + (r_py - r_ty) ** 2
    # sqrt only matters on coord cells (the PyTorch reference never evaluates
    # it on non-coord rows).  Guard the non-selected branch so masked NaNs
    # cannot appear there; coord cells with negative predicted w/h still give
    # NaN exactly like the reference.
    s_pw = jnp.sqrt(jnp.where(coord, r_pw, 1.0))
    s_ph = jnp.sqrt(jnp.where(coord, r_ph, 1.0))
    wh_cell = (s_pw - jnp.sqrt(r_tw)) ** 2 + (s_ph - jnp.sqrt(r_th)) ** 2
    obj_cell = (r_pc - best_iou) ** 2

    # ----- fuse all masked terms into one per-cell scalar, single reduction --
    coord_terms = lambda_coord * (xy_cell + wh_cell) + obj_cell + class_cell
    cell_loss = (jnp.where(coord, coord_terms, 0.0)
                 + lambda_noobj * jnp.where(noobj, noobj_cell, 0.0))

    # Per-lane partial (sublane reduction only); lanes/tiles summed in XLA.
    out_ref[...] = jnp.sum(cell_loss, axis=0, keepdims=True)[None]


def _round_up(x, m):
    return -(-x // m) * m


def yolo_v1_loss(pred_tensor, target_tensor, *, feature_size=7, num_bboxes=2,
                 num_classes=20, lambda_coord=5.0, lambda_noobj=0.5,
                 max_tile_groups=64):
    S, B, C = feature_size, num_bboxes, num_classes
    NCH = 5 * B + C
    batch = pred_tensor.shape[0]
    assert pred_tensor.shape == (batch, S, S, NCH)
    assert target_tensor.shape == (batch, S, S, NCH)

    M = batch * S * S
    groups = -(-M // 128)                       # lane groups of 128 cells

    # ---- tile-size selection (minimal padding, v7x dual-TC friendly) --------
    max_tg = max(8, (int(max_tile_groups) // 8) * 8)
    if groups < 16:
        # Tiny inputs: one tile spanning the full (unpadded) group dim.  The
        # block's second-to-last dim equals the array dim, so no 8-divisibility
        # requirement and no group padding at all.
        num_tiles, tg, groups_pad = 1, groups, groups
    else:
        groups8 = _round_up(groups, 8)          # pad groups to a multiple of 8
        num_tiles = -(-groups8 // max_tg)
        num_tiles = max(num_tiles, 2)           # keep both v7x TCs busy
        num_tiles = 2 * (-(-num_tiles // 2))    # even -> balanced 2-TC split
        tg = 8 * (-(-(groups8 // 8) // num_tiles))
        groups_pad = tg * num_tiles             # pad waste <= 8*(num_tiles-1)
    M_pad = groups_pad * 128

    def to_lane_major(x):
        # [batch,S,S,NCH] -> [NCH, groups_pad, 128]; cells lane-dense, no
        # channel padding.  Keep native dtype; cast happens in-kernel.
        # TODO(synk): if the upstream model can emit channel-major activations,
        # take them directly and drop this pad+reshape+transpose relayout pass.
        x2 = x.reshape(M, NCH)
        if M_pad > M:
            x2 = jnp.pad(x2, ((0, M_pad - M), (0, 0)))
        return x2.reshape(groups_pad, 128, NCH).transpose(2, 0, 1)

    pred3 = to_lane_major(pred_tensor)
    tgt3 = to_lane_major(target_tensor)

    kernel = functools.partial(
        _yolo_v1_loss_kernel, S=S, B=B, C=C,
        lambda_coord=lambda_coord, lambda_noobj=lambda_noobj)

    partials = pl.pallas_call(
        kernel,
        out_shape=jax.ShapeDtypeStruct((num_tiles, 1, 128), jnp.float32),
        grid=(num_tiles,),
        in_specs=[pl.BlockSpec((NCH, tg, 128), lambda i: (0, i, 0)),
                  pl.BlockSpec((NCH, tg, 128), lambda i: (0, i, 0))],
        out_specs=pl.BlockSpec((1, 1, 128), lambda i: (i, 0, 0)),
        compiler_params=pltpu.CompilerParams(
            dimension_semantics=("parallel",)),
    )(pred3, tgt3)

    return jnp.sum(partials) / float(batch)


def _yolo_v1_loss_ref(pred, tgt, *, S=7, B=2, C=20,
                      lambda_coord=5.0, lambda_noobj=0.5):
    """Pure-JAX dense reference (same math, no Pallas) for validation."""
    N = 5 * B + C
    p = pred.reshape(-1, N).astype(jnp.float32)
    t = tgt.reshape(-1, N).astype(jnp.float32)
    t_conf = t[:, 4]
    coord = t_conf > 0
    noobj = t_conf == 0
    noobj_cell = sum(((p[:, 4 + 5 * b] - t[:, 4 + 5 * b]) ** 2 for b in range(B)))
    class_cell = jnp.sum((p[:, 5 * B:] - t[:, 5 * B:]) ** 2, axis=1)
    inv_S = 1.0 / S
    tx, ty, tw, th = t[:, 0], t[:, 1], t[:, 2], t[:, 3]
    t_x1 = tx * inv_S - 0.5 * tw; t_y1 = ty * inv_S - 0.5 * th
    t_x2 = tx * inv_S + 0.5 * tw; t_y2 = ty * inv_S + 0.5 * th
    area_t = (t_x2 - t_x1) * (t_y2 - t_y1)
    ious = []
    for b in range(B):
        px, py, pw, ph = p[:, 5 * b], p[:, 5 * b + 1], p[:, 5 * b + 2], p[:, 5 * b + 3]
        p_x1 = px * inv_S - 0.5 * pw; p_y1 = py * inv_S - 0.5 * ph
        p_x2 = px * inv_S + 0.5 * pw; p_y2 = py * inv_S + 0.5 * ph
        iw = jnp.maximum(jnp.minimum(p_x2, t_x2) - jnp.maximum(p_x1, t_x1), 0.0)
        ih = jnp.maximum(jnp.minimum(p_y2, t_y2) - jnp.maximum(p_y1, t_y1), 0.0)
        inter = iw * ih
        area_p = (p_x2 - p_x1) * (p_y2 - p_y1)
        ious.append(inter / (area_p + area_t - inter + 1e-10))
    best_iou = ious[0]; flags = []
    for b in range(1, B):
        better = ious[b] > best_iou
        flags.append(better)
        best_iou = jnp.where(better, ious[b], best_iou)

    def pick(arr, ch):
        v = arr[:, ch]
        for b in range(1, B):
            v = jnp.where(flags[b - 1], arr[:, 5 * b + ch], v)
        return v

    r_px, r_py, r_pw, r_ph, r_pc = (pick(p, c) for c in range(5))
    r_tx, r_ty, r_tw, r_th = (pick(t, c) for c in range(4))
    xy = (r_px - r_tx) ** 2 + (r_py - r_ty) ** 2
    wh = (jnp.sqrt(r_pw) - jnp.sqrt(r_tw)) ** 2 + (jnp.sqrt(r_ph) - jnp.sqrt(r_th)) ** 2
    obj = (r_pc - best_iou) ** 2
    cell = (jnp.where(coord, lambda_coord * (xy + wh) + obj + class_cell, 0.0)
            + lambda_noobj * jnp.where(noobj, noobj_cell, 0.0))
    return jnp.sum(cell) / float(pred.shape[0])


def _make_example(key, batch, S, B, C):
    N = 5 * B + C
    k1, k2, k3, k4 = jax.random.split(key, 4)
    # predictions in (0, 1) so sqrt(w), sqrt(h) stay real (sigmoid-like outputs)
    pred = jax.random.uniform(k1, (batch, S, S, N), jnp.float32,
                              minval=0.05, maxval=0.95)
    # YOLO-style target: some object cells (conf=1, a box, one-hot class), rest 0
    obj_mask = (jax.random.uniform(k2, (batch, S, S)) > 0.8).astype(jnp.float32)
    box = jax.random.uniform(k3, (batch, S, S, 4), jnp.float32,
                             minval=0.2, maxval=0.8)
    cls_id = jax.random.randint(k4, (batch, S, S), 0, C)
    cls_onehot = jax.nn.one_hot(cls_id, C, dtype=jnp.float32)
    tgt = jnp.zeros((batch, S, S, N), jnp.float32)
    for b in range(B):
        tgt = tgt.at[..., 5 * b:5 * b + 4].set(box * obj_mask[..., None])
        tgt = tgt.at[..., 5 * b + 4].set(obj_mask)
    tgt = tgt.at[..., 5 * B:].set(cls_onehot * obj_mask[..., None])
    return pred, tgt


if __name__ == "__main__":
    key = jax.random.PRNGKey(0)
    S, B, C = 7, 2, 20

    loss_fn = jax.jit(functools.partial(
        yolo_v1_loss, feature_size=S, num_bboxes=B, num_classes=C))

    # Case 1: tiny batch -> single full-extent tile, no group padding.
    pred, tgt = _make_example(key, 2, S, B, C)
    loss = jax.block_until_ready(loss_fn(pred, tgt))
    assert bool(jnp.isfinite(loss)), loss
    ref = jax.block_until_ready(_yolo_v1_loss_ref(pred, tgt, S=S, B=B, C=C))
    assert bool(jnp.allclose(loss, ref, rtol=1e-4, atol=1e-4)), (loss, ref)

    # Case 2: larger batch -> multi-tile "parallel" grid path (v7x dual-TC).
    pred2, tgt2 = _make_example(jax.random.PRNGKey(1), 48, S, B, C)
    loss2 = jax.block_until_ready(loss_fn(pred2, tgt2))
    assert bool(jnp.isfinite(loss2)), loss2
    ref2 = jax.block_until_ready(_yolo_v1_loss_ref(pred2, tgt2, S=S, B=B, C=C))
    assert bool(jnp.allclose(loss2, ref2, rtol=1e-4, atol=1e-4)), (loss2, ref2)

    print("KERNEL_OK")
</pallas_src>

<mosaic_0001>
module attributes {stable_mosaic.version = 11 : i64} {
  func.func @_yolo_v1_loss_kernel(%arg0: i32, %arg1: memref<30x1x128xf32, #tpu.memory_space<vmem>>, %arg2: memref<30x1x128xf32, #tpu.memory_space<vmem>>, %arg3: memref<1x1x128xf32, #tpu.memory_space<vmem>>) attributes {dimension_semantics = [#tpu.dimension_semantics<parallel>], iteration_bounds = array<i64: 1>, scalar_prefetch = 0 : i64, scratch_operands = 0 : i64, tpu.core_type = #tpu.core_type<tc>, window_params = [{transform_indices = @transform_0, window_bounds = array<i64: 30, 1, 128>}, {transform_indices = @transform_1, window_bounds = array<i64: 30, 1, 128>}, {transform_indices = @transform_2, window_bounds = array<i64: 1, 1, 128>}]} {
    %c0 = arith.constant 0 : index
    %c0_0 = arith.constant 0 : index
    %c0_1 = arith.constant 0 : index
    %0 = vector.load %arg2[%c0, %c0_0, %c0_1] : memref<30x1x128xf32, #tpu.memory_space<vmem>>, vector<1x1x128xf32>
    %1 = vector.shape_cast %0 : vector<1x1x128xf32> to vector<1x128xf32>
    %c1 = arith.constant 1 : index
    %c0_2 = arith.constant 0 : index
    %c0_3 = arith.constant 0 : index
    %2 = vector.load %arg2[%c1, %c0_2, %c0_3] : memref<30x1x128xf32, #tpu.memory_space<vmem>>, vector<1x1x128xf32>
    %3 = vector.shape_cast %2 : vector<1x1x128xf32> to vector<1x128xf32>
    %c2 = arith.constant 2 : index
    %c0_4 = arith.constant 0 : index
    %c0_5 = arith.constant 0 : index
    %4 = vector.load %arg2[%c2, %c0_4, %c0_5] : memref<30x1x128xf32, #tpu.memory_space<vmem>>, vector<1x1x128xf32>
    %5 = vector.shape_cast %4 : vector<1x1x128xf32> to vector<1x128xf32>
    %c3 = arith.constant 3 : index
    %c0_6 = arith.constant 0 : index
    %c0_7 = arith.constant 0 : index
    %6 = vector.load %arg2[%c3, %c0_6, %c0_7] : memref<30x1x128xf32, #tpu.memory_space<vmem>>, vector<1x1x128xf32>
    %7 = vector.shape_cast %6 : vector<1x1x128xf32> to vector<1x128xf32>
    %c4 = arith.constant 4 : index
    %c0_8 = arith.constant 0 : index
    %c0_9 = arith.constant 0 : index
    %8 = vector.load %arg2[%c4, %c0_8, %c0_9] : memref<30x1x128xf32, #tpu.memory_space<vmem>>, vector<1x1x128xf32>
    %9 = vector.shape_cast %8 : vector<1x1x128xf32> to vector<1x128xf32>
    %cst = arith.constant 0.000000e+00 : f32
    %10 = vector.broadcast %cst : f32 to vector<1x128xf32>
    %11 = arith.cmpf ogt, %9, %10 : vector<1x128xf32>
    %cst_10 = arith.constant 0.000000e+00 : f32
    %12 = vector.broadcast %cst_10 : f32 to vector<1x128xf32>
    %13 = arith.cmpf oeq, %9, %12 : vector<1x128xf32>
    %cst_11 = arith.constant 0.142857149 : f32
    %14 = vector.broadcast %cst_11 : f32 to vector<1x128xf32>
    %15 = arith.mulf %1, %14 : vector<1x128xf32>
    %cst_12 = arith.constant 5.000000e-01 : f32
    %16 = vector.broadcast %cst_12 : f32 to vector<1x128xf32>
    %17 = arith.mulf %16, %5 : vector<1x128xf32>
    %18 = arith.subf %15, %17 : vector<1x128xf32>
    %cst_13 = arith.constant 0.142857149 : f32
    %19 = vector.broadcast %cst_13 : f32 to vector<1x128xf32>
    %20 = arith.mulf %3, %19 : vector<1x128xf32>
    %cst_14 = arith.constant 5.000000e-01 : f32
    %21 = vector.broadcast %cst_14 : f32 to vector<1x128xf32>
    %22 = arith.mulf %21, %7 : vector<1x128xf32>
    %23 = arith.subf %20, %22 : vector<1x128xf32>
    %cst_15 = arith.constant 0.142857149 : f32
    %24 = vector.broadcast %cst_15 : f32 to vector<1x128xf32>
    %25 = arith.mulf %1, %24 : vector<1x128xf32>
    %cst_16 = arith.constant 5.000000e-01 : f32
    %26 = vector.broadcast %cst_16 : f32 to vector<1x128xf32>
    %27 = arith.mulf %26, %5 : vector<1x128xf32>
    %28 = arith.addf %25, %27 : vector<1x128xf32>
    %cst_17 = arith.constant 0.142857149 : f32
    %29 = vector.broadcast %cst_17 : f32 to vector<1x128xf32>
    %30 = arith.mulf %3, %29 : vector<1x128xf32>
    %cst_18 = arith.constant 5.000000e-01 : f32
    %31 = vector.broadcast %cst_18 : f32 to vector<1x128xf32>
    %32 = arith.mulf %31, %7 : vector<1x128xf32>
    %33 = arith.addf %30, %32 : vector<1x128xf32>
    %34 = arith.subf %28, %18 : vector<1x128xf32>
    %35 = arith.subf %33, %23 : vector<1x128xf32>
    %36 = arith.mulf %34, %35 : vector<1x128xf32>
    %cst_19 = arith.constant 0.000000e+00 : f32
    %37 = vector.broadcast %cst_19 : f32 to vector<1x128xf32>
    %c0_20 = arith.constant 0 : index
    %c0_21 = arith.constant 0 : index
    %c0_22 = arith.constant 0 : index
    %38 = vector.load %arg1[%c0_20, %c0_21, %c0_22] : memref<30x1x128xf32, #tpu.memory_space<vmem>>, vector<1x1x128xf32>
    %39 = vector.shape_cast %38 : vector<1x1x128xf32> to vector<1x128xf32>
    %c1_23 = arith.constant 1 : index
    %c0_24 = arith.constant 0 : index
    %c0_25 = arith.constant 0 : index
    %40 = vector.load %arg1[%c1_23, %c0_24, %c0_25] : memref<30x1x128xf32, #tpu.memory_space<vmem>>, vector<1x1x128xf32>
    %41 = vector.shape_cast %40 : vector<1x1x128xf32> to vector<1x128xf32>
    %c2_26 = arith.constant 2 : index
    %c0_27 = arith.constant 0 : index
    %c0_28 = arith.constant 0 : index
    %42 = vector.load %arg1[%c2_26, %c0_27, %c0_28] : memref<30x1x128xf32, #tpu.memory_space<vmem>>, vector<1x1x128xf32>
    %43 = vector.shape_cast %42 : vector<1x1x128xf32> to vector<1x128xf32>
    %c3_29 = arith.constant 3 : index
    %c0_30 = arith.constant 0 : index
    %c0_31 = arith.constant 0 : index
    %44 = vector.load %arg1[%c3_29, %c0_30, %c0_31] : memref<30x1x128xf32, #tpu.memory_space<vmem>>, vector<1x1x128xf32>
    %45 = vector.shape_cast %44 : vector<1x1x128xf32> to vector<1x128xf32>
    %c4_32 = arith.constant 4 : index
    %c0_33 = arith.constant 0 : index
    %c0_34 = arith.constant 0 : index
    %46 = vector.load %arg1[%c4_32, %c0_33, %c0_34] : memref<30x1x128xf32, #tpu.memory_space<vmem>>, vector<1x1x128xf32>
    %47 = vector.shape_cast %46 : vector<1x1x128xf32> to vector<1x128xf32>
    %48 = arith.subf %47, %9 : vector<1x128xf32>
    %49 = arith.mulf %48, %48 : vector<1x128xf32>
    %50 = arith.addf %37, %49 : vector<1x128xf32>
    %cst_35 = arith.constant 0.142857149 : f32
    %51 = vector.broadcast %cst_35 : f32 to vector<1x128xf32>
    %52 = arith.mulf %39, %51 : vector<1x128xf32>
    %cst_36 = arith.constant 5.000000e-01 : f32
    %53 = vector.broadcast %cst_36 : f32 to vector<1x128xf32>
    %54 = arith.mulf %53, %43 : vector<1x128xf32>
    %55 = arith.subf %52, %54 : vector<1x128xf32>
    %cst_37 = arith.constant 0.142857149 : f32
    %56 = vector.broadcast %cst_37 : f32 to vector<1x128xf32>
    %57 = arith.mulf %41, %56 : vector<1x128xf32>
    %cst_38 = arith.constant 5.000000e-01 : f32
    %58 = vector.broadcast %cst_38 : f32 to vector<1x128xf32>
    %59 = arith.mulf %58, %45 : vector<1x128xf32>
    %60 = arith.subf %57, %59 : vector<1x128xf32>
    %cst_39 = arith.constant 0.142857149 : f32
    %61 = vector.broadcast %cst_39 : f32 to vector<1x128xf32>
    %62 = arith.mulf %39, %61 : vector<1x128xf32>
    %cst_40 = arith.constant 5.000000e-01 : f32
    %63 = vector.broadcast %cst_40 : f32 to vector<1x128xf32>
    %64 = arith.mulf %63, %43 : vector<1x128xf32>
    %65 = arith.addf %62, %64 : vector<1x128xf32>
    %cst_41 = arith.constant 0.142857149 : f32
    %66 = vector.broadcast %cst_41 : f32 to vector<1x128xf32>
    %67 = arith.mulf %41, %66 : vector<1x128xf32>
    %cst_42 = arith.constant 5.000000e-01 : f32
    %68 = vector.broadcast %cst_42 : f32 to vector<1x128xf32>
    %69 = arith.mulf %68, %45 : vector<1x128xf32>
    %70 = arith.addf %67, %69 : vector<1x128xf32>
    %71 = arith.minimumf %65, %28 : vector<1x128xf32>
    %72 = arith.maximumf %55, %18 : vector<1x128xf32>
    %73 = arith.subf %71, %72 : vector<1x128xf32>
    %cst_43 = arith.constant 0.000000e+00 : f32
    %74 = vector.broadcast %cst_43 : f32 to vector<1x128xf32>
    %75 = arith.maximumf %73, %74 : vector<1x128xf32>
    %76 = arith.minimumf %70, %33 : vector<1x128xf32>
    %77 = arith.maximumf %60, %23 : vector<1x128xf32>
    %78 = arith.subf %76, %77 : vector<1x128xf32>
    %cst_44 = arith.constant 0.000000e+00 : f32
    %79 = vector.broadcast %cst_44 : f32 to vector<1x128xf32>
    %80 = arith.maximumf %78, %79 : vector<1x128xf32>
    %81 = arith.mulf %75, %80 : vector<1x128xf32>
    %82 = arith.subf %65, %55 : vector<1x128xf32>
    %83 = arith.subf %70, %60 : vector<1x128xf32>
    %84 = arith.mulf %82, %83 : vector<1x128xf32>
    %85 = arith.addf %84, %36 : vector<1x128xf32>
    %86 = arith.subf %85, %81 : vector<1x128xf32>
    %cst_45 = arith.constant 1.000000e-10 : f32
    %87 = vector.broadcast %cst_45 : f32 to vector<1x128xf32>
    %88 = arith.addf %86, %87 : vector<1x128xf32>
    %89 = arith.divf %81, %88 : vector<1x128xf32>
    %c5 = arith.constant 5 : index
    %c0_46 = arith.constant 0 : index
    %c0_47 = arith.constant 0 : index
    %90 = vector.load %arg2[%c5, %c0_46, %c0_47] : memref<30x1x128xf32, #tpu.memory_space<vmem>>, vector<1x1x128xf32>
    %91 = vector.shape_cast %90 : vector<1x1x128xf32> to vector<1x128xf32>
    %c6 = arith.constant 6 : index
    %c0_48 = arith.constant 0 : index
    %c0_49 = arith.constant 0 : index
    %92 = vector.load %arg2[%c6, %c0_48, %c0_49] : memref<30x1x128xf32, #tpu.memory_space<vmem>>, vector<1x1x128xf32>
    %93 = vector.shape_cast %92 : vector<1x1x128xf32> to vector<1x128xf32>
    %c7 = arith.constant 7 : index
    %c0_50 = arith.constant 0 : index
    %c0_51 = arith.constant 0 : index
    %94 = vector.load %arg2[%c7, %c0_50, %c0_51] : memref<30x1x128xf32, #tpu.memory_space<vmem>>, vector<1x1x128xf32>
    %95 = vector.shape_cast %94 : vector<1x1x128xf32> to vector<1x128xf32>
    %c8 = arith.constant 8 : index
    %c0_52 = arith.constant 0 : index
    %c0_53 = arith.constant 0 : index
    %96 = vector.load %arg2[%c8, %c0_52, %c0_53] : memref<30x1x128xf32, #tpu.memory_space<vmem>>, vector<1x1x128xf32>
    %97 = vector.shape_cast %96 : vector<1x1x128xf32> to vector<1x128xf32>
    %c9 = arith.constant 9 : index
    %c0_54 = arith.constant 0 : index
    %c0_55 = arith.constant 0 : index
    %98 = vector.load %arg2[%c9, %c0_54, %c0_55] : memref<30x1x128xf32, #tpu.memory_space<vmem>>, vector<1x1x128xf32>
    %99 = vector.shape_cast %98 : vector<1x1x128xf32> to vector<1x128xf32>
    %c5_56 = arith.constant 5 : index
    %c0_57 = arith.constant 0 : index
    %c0_58 = arith.constant 0 : index
    %100 = vector.load %arg1[%c5_56, %c0_57, %c0_58] : memref<30x1x128xf32, #tpu.memory_space<vmem>>, vector<1x1x128xf32>
    %101 = vector.shape_cast %100 : vector<1x1x128xf32> to vector<1x128xf32>
    %c6_59 = arith.constant 6 : index
    %c0_60 = arith.constant 0 : index
    %c0_61 = arith.constant 0 : index
    %102 = vector.load %arg1[%c6_59, %c0_60, %c0_61] : memref<30x1x128xf32, #tpu.memory_space<vmem>>, vector<1x1x128xf32>
    %103 = vector.shape_cast %102 : vector<1x1x128xf32> to vector<1x128xf32>
    %c7_62 = arith.constant 7 : index
    %c0_63 = arith.constant 0 : index
    %c0_64 = arith.constant 0 : index
    %104 = vector.load %arg1[%c7_62, %c0_63, %c0_64] : memref<30x1x128xf32, #tpu.memory_space<vmem>>, vector<1x1x128xf32>
    %105 = vector.shape_cast %104 : vector<1x1x128xf32> to vector<1x128xf32>
    %c8_65 = arith.constant 8 : index
    %c0_66 = arith.constant 0 : index
    %c0_67 = arith.constant 0 : index
    %106 = vector.load %arg1[%c8_65, %c0_66, %c0_67] : memref<30x1x128xf32, #tpu.memory_space<vmem>>, vector<1x1x128xf32>
    %107 = vector.shape_cast %106 : vector<1x1x128xf32> to vector<1x128xf32>
    %c9_68 = arith.constant 9 : index
    %c0_69 = arith.constant 0 : index
    %c0_70 = arith.constant 0 : index
    %108 = vector.load %arg1[%c9_68, %c0_69, %c0_70] : memref<30x1x128xf32, #tpu.memory_space<vmem>>, vector<1x1x128xf32>
    %109 = vector.shape_cast %108 : vector<1x1x128xf32> to vector<1x128xf32>
    %110 = arith.subf %109, %99 : vector<1x128xf32>
    %111 = arith.mulf %110, %110 : vector<1x128xf32>
    %112 = arith.addf %50, %111 : vector<1x128xf32>
    %cst_71 = arith.constant 0.142857149 : f32
    %113 = vector.broadcast %cst_71 : f32 to vector<1x128xf32>
    %114 = arith.mulf %101, %113 : vector<1x128xf32>
    %cst_72 = arith.constant 5.000000e-01 : f32
    %115 = vector.broadcast %cst_72 : f32 to vector<1x128xf32>
    %116 = arith.mulf %115, %105 : vector<1x128xf32>
    %117 = arith.subf %114, %116 : vector<1x128xf32>
    %cst_73 = arith.constant 0.142857149 : f32
    %118 = vector.broadcast %cst_73 : f32 to vector<1x128xf32>
    %119 = arith.mulf %103, %118 : vector<1x128xf32>
    %cst_74 = arith.constant 5.000000e-01 : f32
    %120 = vector.broadcast %cst_74 : f32 to vector<1x128xf32>
    %121 = arith.mulf %120, %107 : vector<1x128xf32>
    %122 = arith.subf %119, %121 : vector<1x128xf32>
    %cst_75 = arith.constant 0.142857149 : f32
    %123 = vector.broadcast %cst_75 : f32 to vector<1x128xf32>
    %124 = arith.mulf %101, %123 : vector<1x128xf32>
    %cst_76 = arith.constant 5.000000e-01 : f32
    %125 = vector.broadcast %cst_76 : f32 to vector<1x128xf32>
    %126 = arith.mulf %125, %105 : vector<1x128xf32>
    %127 = arith.addf %124, %126 : vector<1x128xf32>
    %cst_77 = arith.constant 0.142857149 : f32
    %128 = vector.broadcast %cst_77 : f32 to vector<1x128xf32>
    %129 = arith.mulf %103, %128 : vector<1x128xf32>
    %cst_78 = arith.constant 5.000000e-01 : f32
    %130 = vector.broadcast %cst_78 : f32 to vector<1x128xf32>
    %131 = arith.mulf %130, %107 : vector<1x128xf32>
    %132 = arith.addf %129, %131 : vector<1x128xf32>
    %133 = arith.minimumf %127, %28 : vector<1x128xf32>
    %134 = arith.maximumf %117, %18 : vector<1x128xf32>
    %135 = arith.subf %133, %134 : vector<1x128xf32>
    %cst_79 = arith.constant 0.000000e+00 : f32
    %136 = vector.broadcast %cst_79 : f32 to vector<1x128xf32>
    %137 = arith.maximumf %135, %136 : vector<1x128xf32>
    %138 = arith.minimumf %132, %33 : vector<1x128xf32>
    %139 = arith.maximumf %122, %23 : vector<1x128xf32>
    %140 = arith.subf %138, %139 : vector<1x128xf32>
    %cst_80 = arith.constant 0.000000e+00 : f32
    %141 = vector.broadcast %cst_80 : f32 to vector<1x128xf32>
    %142 = arith.maximumf %140, %141 : vector<1x128xf32>
    %143 = arith.mulf %137, %142 : vector<1x128xf32>
    %144 = arith.subf %127, %117 : vector<1x128xf32>
    %145 = arith.subf %132, %122 : vector<1x128xf32>
    %146 = arith.mulf %144, %145 : vector<1x128xf32>
    %147 = arith.addf %146, %36 : vector<1x128xf32>
    %148 = arith.subf %147, %143 : vector<1x128xf32>
    %cst_81 = arith.constant 1.000000e-10 : f32
    %149 = vector.broadcast %cst_81 : f32 to vector<1x128xf32>
    %150 = arith.addf %148, %149 : vector<1x128xf32>
    %151 = arith.divf %143, %150 : vector<1x128xf32>
    %152 = arith.cmpf ogt, %151, %89 : vector<1x128xf32>
    %153 = arith.select %152, %151, %89 : vector<1x128xi1>, vector<1x128xf32>
    %154 = arith.select %152, %101, %39 : vector<1x128xi1>, vector<1x128xf32>
    %155 = arith.select %152, %103, %41 : vector<1x128xi1>, vector<1x128xf32>
    %156 = arith.select %152, %105, %43 : vector<1x128xi1>, vector<1x128xf32>
    %157 = arith.select %152, %107, %45 : vector<1x128xi1>, vector<1x128xf32>
    %158 = arith.select %152, %109, %47 : vector<1x128xi1>, vector<1x128xf32>
    %159 = arith.select %152, %91, %1 : vector<1x128xi1>, vector<1x128xf32>
    %160 = arith.select %152, %93, %3 : vector<1x128xi1>, vector<1x128xf32>
    %161 = arith.select %152, %95, %5 : vector<1x128xi1>, vector<1x128xf32>
    %162 = arith.select %152, %97, %7 : vector<1x128xi1>, vector<1x128xf32>
    %cst_82 = arith.constant 0.000000e+00 : f32
    %163 = vector.broadcast %cst_82 : f32 to vector<1x128xf32>
    %c10 = arith.constant 10 : index
    %c0_83 = arith.constant 0 : index
    %c0_84 = arith.constant 0 : index
    %164 = vector.load %arg1[%c10, %c0_83, %c0_84] : memref<30x1x128xf32, #tpu.memory_space<vmem>>, vector<1x1x128xf32>
    %165 = vector.shape_cast %164 : vector<1x1x128xf32> to vector<1x128xf32>
    %c10_85 = arith.constant 10 : index
    %c0_86 = arith.constant 0 : index
    %c0_87 = arith.constant 0 : index
    %166 = vector.load %arg2[%c10_85, %c0_86, %c0_87] : memref<30x1x128xf32, #tpu.memory_space<vmem>>, vector<1x1x128xf32>
    %167 = vector.shape_cast %166 : vector<1x1x128xf32> to vector<1x128xf32>
    %168 = arith.subf %165, %167 : vector<1x128xf32>
    %169 = arith.mulf %168, %168 : vector<1x128xf32>
    %170 = arith.addf %163, %169 : vector<1x128xf32>
    %c11 = arith.constant 11 : index
    %c0_88 = arith.constant 0 : index
    %c0_89 = arith.constant 0 : index
    %171 = vector.load %arg1[%c11, %c0_88, %c0_89] : memref<30x1x128xf32, #tpu.memory_space<vmem>>, vector<1x1x128xf32>
    %172 = vector.shape_cast %171 : vector<1x1x128xf32> to vector<1x128xf32>
    %c11_90 = arith.constant 11 : index
    %c0_91 = arith.constant 0 : index
    %c0_92 = arith.constant 0 : index
    %173 = vector.load %arg2[%c11_90, %c0_91, %c0_92] : memref<30x1x128xf32, #tpu.memory_space<vmem>>, vector<1x1x128xf32>
    %174 = vector.shape_cast %173 : vector<1x1x128xf32> to vector<1x128xf32>
    %175 = arith.subf %172, %174 : vector<1x128xf32>
    %176 = arith.mulf %175, %175 : vector<1x128xf32>
    %177 = arith.addf %170, %176 : vector<1x128xf32>
    %c12 = arith.constant 12 : index
    %c0_93 = arith.constant 0 : index
    %c0_94 = arith.constant 0 : index
    %178 = vector.load %arg1[%c12, %c0_93, %c0_94] : memref<30x1x128xf32, #tpu.memory_space<vmem>>, vector<1x1x128xf32>
    %179 = vector.shape_cast %178 : vector<1x1x128xf32> to vector<1x128xf32>
    %c12_95 = arith.constant 12 : index
    %c0_96 = arith.constant 0 : index
    %c0_97 = arith.constant 0 : index
    %180 = vector.load %arg2[%c12_95, %c0_96, %c0_97] : memref<30x1x128xf32, #tpu.memory_space<vmem>>, vector<1x1x128xf32>
    %181 = vector.shape_cast %180 : vector<1x1x128xf32> to vector<1x128xf32>
    %182 = arith.subf %179, %181 : vector<1x128xf32>
    %183 = arith.mulf %182, %182 : vector<1x128xf32>
    %184 = arith.addf %177, %183 : vector<1x128xf32>
    %c13 = arith.constant 13 : index
    %c0_98 = arith.constant 0 : index
    %c0_99 = arith.constant 0 : index
    %185 = vector.load %arg1[%c13, %c0_98, %c0_99] : memref<30x1x128xf32, #tpu.memory_space<vmem>>, vector<1x1x128xf32>
    %186 = vector.shape_cast %185 : vector<1x1x128xf32> to vector<1x128xf32>
    %c13_100 = arith.constant 13 : index
    %c0_101 = arith.constant 0 : index
    %c0_102 = arith.constant 0 : index
    %187 = vector.load %arg2[%c13_100, %c0_101, %c0_102] : memref<30x1x128xf32, #tpu.memory_space<vmem>>, vector<1x1x128xf32>
    %188 = vector.shape_cast %187 : vector<1x1x128xf32> to vector<1x128xf32>
    %189 = arith.subf %186, %188 : vector<1x128xf32>
    %190 = arith.mulf %189, %189 : vector<1x128xf32>
    %191 = arith.addf %184, %190 : vector<1x128xf32>
    %c14 = arith.constant 14 : index
    %c0_103 = arith.constant 0 : index
    %c0_104 = arith.constant 0 : index
    %192 = vector.load %arg1[%c14, %c0_103, %c0_104] : memref<30x1x128xf32, #tpu.memory_space<vmem>>, vector<1x1x128xf32>
    %193 = vector.shape_cast %192 : vector<1x1x128xf32> to vector<1x128xf32>
    %c14_105 = arith.constant 14 : index
    %c0_106 = arith.constant 0 : index
    %c0_107 = arith.constant 0 : index
    %194 = vector.load %arg2[%c14_105, %c0_106, %c0_107] : memref<30x1x128xf32, #tpu.memory_space<vmem>>, vector<1x1x128xf32>
    %195 = vector.shape_cast %194 : vector<1x1x128xf32> to vector<1x128xf32>
    %196 = arith.subf %193, %195 : vector<1x128xf32>
    %197 = arith.mulf %196, %196 : vector<1x128xf32>
    %198 = arith.addf %191, %197 : vector<1x128xf32>
    %c15 = arith.constant 15 : index
    %c0_108 = arith.constant 0 : index
    %c0_109 = arith.constant 0 : index
    %199 = vector.load %arg1[%c15, %c0_108, %c0_109] : memref<30x1x128xf32, #tpu.memory_space<vmem>>, vector<1x1x128xf32>
    %200 = vector.shape_cast %199 : vector<1x1x128xf32> to vector<1x128xf32>
    %c15_110 = arith.constant 15 : index
    %c0_111 = arith.constant 0 : index
    %c0_112 = arith.constant 0 : index
    %201 = vector.load %arg2[%c15_110, %c0_111, %c0_112] : memref<30x1x128xf32, #tpu.memory_space<vmem>>, vector<1x1x128xf32>
    %202 = vector.shape_cast %201 : vector<1x1x128xf32> to vector<1x128xf32>
    %203 = arith.subf %200, %202 : vector<1x128xf32>
    %204 = arith.mulf %203, %203 : vector<1x128xf32>
    %205 = arith.addf %198, %204 : vector<1x128xf32>
    %c16 = arith.constant 16 : index
    %c0_113 = arith.constant 0 : index
    %c0_114 = arith.constant 0 : index
    %206 = vector.load %arg1[%c16, %c0_113, %c0_114] : memref<30x1x128xf32, #tpu.memory_space<vmem>>, vector<1x1x128xf32>
    %207 = vector.shape_cast %206 : vector<1x1x128xf32> to vector<1x128xf32>
    %c16_115 = arith.constant 16 : index
    %c0_116 = arith.constant 0 : index
    %c0_117 = arith.constant 0 : index
    %208 = vector.load %arg2[%c16_115, %c0_116, %c0_117] : memref<30x1x128xf32, #tpu.memory_space<vmem>>, vector<1x1x128xf32>
    %209 = vector.shape_cast %208 : vector<1x1x128xf32> to vector<1x128xf32>
    %210 = arith.subf %207, %209 : vector<1x128xf32>
    %211 = arith.mulf %210, %210 : vector<1x128xf32>
    %212 = arith.addf %205, %211 : vector<1x128xf32>
    %c17 = arith.constant 17 : index
    %c0_118 = arith.constant 0 : index
    %c0_119 = arith.constant 0 : index
    %213 = vector.load %arg1[%c17, %c0_118, %c0_119] : memref<30x1x128xf32, #tpu.memory_space<vmem>>, vector<1x1x128xf32>
    %214 = vector.shape_cast %213 : vector<1x1x128xf32> to vector<1x128xf32>
    %c17_120 = arith.constant 17 : index
    %c0_121 = arith.constant 0 : index
    %c0_122 = arith.constant 0 : index
    %215 = vector.load %arg2[%c17_120, %c0_121, %c0_122] : memref<30x1x128xf32, #tpu.memory_space<vmem>>, vector<1x1x128xf32>
    %216 = vector.shape_cast %215 : vector<1x1x128xf32> to vector<1x128xf32>
    %217 = arith.subf %214, %216 : vector<1x128xf32>
    %218 = arith.mulf %217, %217 : vector<1x128xf32>
    %219 = arith.addf %212, %218 : vector<1x128xf32>
    %c18 = arith.constant 18 : index
    %c0_123 = arith.constant 0 : index
    %c0_124 = arith.constant 0 : index
    %220 = vector.load %arg1[%c18, %c0_123, %c0_124] : memref<30x1x128xf32, #tpu.memory_space<vmem>>, vector<1x1x128xf32>
    %221 = vector.shape_cast %220 : vector<1x1x128xf32> to vector<1x128xf32>
    %c18_125 = arith.constant 18 : index
    %c0_126 = arith.constant 0 : index
    %c0_127 = arith.constant 0 : index
    %222 = vector.load %arg2[%c18_125, %c0_126, %c0_127] : memref<30x1x128xf32, #tpu.memory_space<vmem>>, vector<1x1x128xf32>
    %223 = vector.shape_cast %222 : vector<1x1x128xf32> to vector<1x128xf32>
    %224 = arith.subf %221, %223 : vector<1x128xf32>
    %225 = arith.mulf %224, %224 : vector<1x128xf32>
    %226 = arith.addf %219, %225 : vector<1x128xf32>
    %c19 = arith.constant 19 : index
    %c0_128 = arith.constant 0 : index
    %c0_129 = arith.constant 0 : index
    %227 = vector.load %arg1[%c19, %c0_128, %c0_129] : memref<30x1x128xf32, #tpu.memory_space<vmem>>, vector<1x1x128xf32>
    %228 = vector.shape_cast %227 : vector<1x1x128xf32> to vector<1x128xf32>
    %c19_130 = arith.constant 19 : index
    %c0_131 = arith.constant 0 : index
    %c0_132 = arith.constant 0 : index
    %229 = vector.load %arg2[%c19_130, %c0_131, %c0_132] : memref<30x1x128xf32, #tpu.memory_space<vmem>>, vector<1x1x128xf32>
    %230 = vector.shape_cast %229 : vector<1x1x128xf32> to vector<1x128xf32>
    %231 = arith.subf %228, %230 : vector<1x128xf32>
    %232 = arith.mulf %231, %231 : vector<1x128xf32>
    %233 = arith.addf %226, %232 : vector<1x128xf32>
    %c20 = arith.constant 20 : index
    %c0_133 = arith.constant 0 : index
    %c0_134 = arith.constant 0 : index
    %234 = vector.load %arg1[%c20, %c0_133, %c0_134] : memref<30x1x128xf32, #tpu.memory_space<vmem>>, vector<1x1x128xf32>
    %235 = vector.shape_cast %234 : vector<1x1x128xf32> to vector<1x128xf32>
    %c20_135 = arith.constant 20 : index
    %c0_136 = arith.constant 0 : index
    %c0_137 = arith.constant 0 : index
    %236 = vector.load %arg2[%c20_135, %c0_136, %c0_137] : memref<30x1x128xf32, #tpu.memory_space<vmem>>, vector<1x1x128xf32>
    %237 = vector.shape_cast %236 : vector<1x1x128xf32> to vector<1x128xf32>
    %238 = arith.subf %235, %237 : vector<1x128xf32>
    %239 = arith.mulf %238, %238 : vector<1x128xf32>
    %240 = arith.addf %233, %239 : vector<1x128xf32>
    %c21 = arith.constant 21 : index
    %c0_138 = arith.constant 0 : index
    %c0_139 = arith.constant 0 : index
    %241 = vector.load %arg1[%c21, %c0_138, %c0_139] : memref<30x1x128xf32, #tpu.memory_space<vmem>>, vector<1x1x128xf32>
    %242 = vector.shape_cast %241 : vector<1x1x128xf32> to vector<1x128xf32>
    %c21_140 = arith.constant 21 : index
    %c0_141 = arith.constant 0 : index
    %c0_142 = arith.constant 0 : index
    %243 = vector.load %arg2[%c21_140, %c0_141, %c0_142] : memref<30x1x128xf32, #tpu.memory_space<vmem>>, vector<1x1x128xf32>
    %244 = vector.shape_cast %243 : vector<1x1x128xf32> to vector<1x128xf32>
    %245 = arith.subf %242, %244 : vector<1x128xf32>
    %246 = arith.mulf %245, %245 : vector<1x128xf32>
    %247 = arith.addf %240, %246 : vector<1x128xf32>
    %c22 = arith.constant 22 : index
    %c0_143 = arith.constant 0 : index
    %c0_144 = arith.constant 0 : index
    %248 = vector.load %arg1[%c22, %c0_143, %c0_144] : memref<30x1x128xf32, #tpu.memory_space<vmem>>, vector<1x1x128xf32>
    %249 = vector.shape_cast %248 : vector<1x1x128xf32> to vector<1x128xf32>
    %c22_145 = arith.constant 22 : index
    %c0_146 = arith.constant 0 : index
    %c0_147 = arith.constant 0 : index
    %250 = vector.load %arg2[%c22_145, %c0_146, %c0_147] : memref<30x1x128xf32, #tpu.memory_space<vmem>>, vector<1x1x128xf32>
    %251 = vector.shape_cast %250 : vector<1x1x128xf32> to vector<1x128xf32>
    %252 = arith.subf %249, %251 : vector<1x128xf32>
    %253 = arith.mulf %252, %252 : vector<1x128xf32>
    %254 = arith.addf %247, %253 : vector<1x128xf32>
    %c23 = arith.constant 23 : index
    %c0_148 = arith.constant 0 : index
    %c0_149 = arith.constant 0 : index
    %255 = vector.load %arg1[%c23, %c0_148, %c0_149] : memref<30x1x128xf32, #tpu.memory_space<vmem>>, vector<1x1x128xf32>
    %256 = vector.shape_cast %255 : vector<1x1x128xf32> to vector<1x128xf32>
    %c23_150 = arith.constant 23 : index
    %c0_151 = arith.constant 0 : index
    %c0_152 = arith.constant 0 : index
    %257 = vector.load %arg2[%c23_150, %c0_151, %c0_152] : memref<30x1x128xf32, #tpu.memory_space<vmem>>, vector<1x1x128xf32>
    %258 = vector.shape_cast %257 : vector<1x1x128xf32> to vector<1x128xf32>
    %259 = arith.subf %256, %258 : vector<1x128xf32>
    %260 = arith.mulf %259, %259 : vector<1x128xf32>
    %261 = arith.addf %254, %260 : vector<1x128xf32>
    %c24 = arith.constant 24 : index
    %c0_153 = arith.constant 0 : index
    %c0_154 = arith.constant 0 : index
    %262 = vector.load %arg1[%c24, %c0_153, %c0_154] : memref<30x1x128xf32, #tpu.memory_space<vmem>>, vector<1x1x128xf32>
    %263 = vector.shape_cast %262 : vector<1x1x128xf32> to vector<1x128xf32>
    %c24_155 = arith.constant 24 : index
    %c0_156 = arith.constant 0 : index
    %c0_157 = arith.constant 0 : index
    %264 = vector.load %arg2[%c24_155, %c0_156, %c0_157] : memref<30x1x128xf32, #tpu.memory_space<vmem>>, vector<1x1x128xf32>
    %265 = vector.shape_cast %264 : vector<1x1x128xf32> to vector<1x128xf32>
    %266 = arith.subf %263, %265 : vector<1x128xf32>
    %267 = arith.mulf %266, %266 : vector<1x128xf32>
    %268 = arith.addf %261, %267 : vector<1x128xf32>
    %c25 = arith.constant 25 : index
    %c0_158 = arith.constant 0 : index
    %c0_159 = arith.constant 0 : index
    %269 = vector.load %arg1[%c25, %c0_158, %c0_159] : memref<30x1x128xf32, #tpu.memory_space<vmem>>, vector<1x1x128xf32>
    %270 = vector.shape_cast %269 : vector<1x1x128xf32> to vector<1x128xf32>
    %c25_160 = arith.constant 25 : index
    %c0_161 = arith.constant 0 : index
    %c0_162 = arith.constant 0 : index
    %271 = vector.load %arg2[%c25_160, %c0_161, %c0_162] : memref<30x1x128xf32, #tpu.memory_space<vmem>>, vector<1x1x128xf32>
    %272 = vector.shape_cast %271 : vector<1x1x128xf32> to vector<1x128xf32>
    %273 = arith.subf %270, %272 : vector<1x128xf32>
    %274 = arith.mulf %273, %273 : vector<1x128xf32>
    %275 = arith.addf %268, %274 : vector<1x128xf32>
    %c26 = arith.constant 26 : index
    %c0_163 = arith.constant 0 : index
    %c0_164 = arith.constant 0 : index
    %276 = vector.load %arg1[%c26, %c0_163, %c0_164] : memref<30x1x128xf32, #tpu.memory_space<vmem>>, vector<1x1x128xf32>
    %277 = vector.shape_cast %276 : vector<1x1x128xf32> to vector<1x128xf32>
    %c26_165 = arith.constant 26 : index
    %c0_166 = arith.constant 0 : index
    %c0_167 = arith.constant 0 : index
    %278 = vector.load %arg2[%c26_165, %c0_166, %c0_167] : memref<30x1x128xf32, #tpu.memory_space<vmem>>, vector<1x1x128xf32>
    %279 = vector.shape_cast %278 : vector<1x1x128xf32> to vector<1x128xf32>
    %280 = arith.subf %277, %279 : vector<1x128xf32>
    %281 = arith.mulf %280, %280 : vector<1x128xf32>
    %282 = arith.addf %275, %281 : vector<1x128xf32>
    %c27 = arith.constant 27 : index
    %c0_168 = arith.constant 0 : index
    %c0_169 = arith.constant 0 : index
    %283 = vector.load %arg1[%c27, %c0_168, %c0_169] : memref<30x1x128xf32, #tpu.memory_space<vmem>>, vector<1x1x128xf32>
    %284 = vector.shape_cast %283 : vector<1x1x128xf32> to vector<1x128xf32>
    %c27_170 = arith.constant 27 : index
    %c0_171 = arith.constant 0 : index
    %c0_172 = arith.constant 0 : index
    %285 = vector.load %arg2[%c27_170, %c0_171, %c0_172] : memref<30x1x128xf32, #tpu.memory_space<vmem>>, vector<1x1x128xf32>
    %286 = vector.shape_cast %285 : vector<1x1x128xf32> to vector<1x128xf32>
    %287 = arith.subf %284, %286 : vector<1x128xf32>
    %288 = arith.mulf %287, %287 : vector<1x128xf32>
    %289 = arith.addf %282, %288 : vector<1x128xf32>
    %c28 = arith.constant 28 : index
    %c0_173 = arith.constant 0 : index
    %c0_174 = arith.constant 0 : index
    %290 = vector.load %arg1[%c28, %c0_173, %c0_174] : memref<30x1x128xf32, #tpu.memory_space<vmem>>, vector<1x1x128xf32>
    %291 = vector.shape_cast %290 : vector<1x1x128xf32> to vector<1x128xf32>
    %c28_175 = arith.constant 28 : index
    %c0_176 = arith.constant 0 : index
    %c0_177 = arith.constant 0 : index
    %292 = vector.load %arg2[%c28_175, %c0_176, %c0_177] : memref<30x1x128xf32, #tpu.memory_space<vmem>>, vector<1x1x128xf32>
    %293 = vector.shape_cast %292 : vector<1x1x128xf32> to vector<1x128xf32>
    %294 = arith.subf %291, %293 : vector<1x128xf32>
    %295 = arith.mulf %294, %294 : vector<1x128xf32>
    %296 = arith.addf %289, %295 : vector<1x128xf32>
    %c29 = arith.constant 29 : index
    %c0_178 = arith.constant 0 : index
    %c0_179 = arith.constant 0 : index
    %297 = vector.load %arg1[%c29, %c0_178, %c0_179] : memref<30x1x128xf32, #tpu.memory_space<vmem>>, vector<1x1x128xf32>
    %298 = vector.shape_cast %297 : vector<1x1x128xf32> to vector<1x128xf32>
    %c29_180 = arith.constant 29 : index
    %c0_181 = arith.constant 0 : index
    %c0_182 = arith.constant 0 : index
    %299 = vector.load %arg2[%c29_180, %c0_181, %c0_182] : memref<30x1x128xf32, #tpu.memory_space<vmem>>, vector<1x1x128xf32>
    %300 = vector.shape_cast %299 : vector<1x1x128xf32> to vector<1x128xf32>
    %301 = arith.subf %298, %300 : vector<1x128xf32>
    %302 = arith.mulf %301, %301 : vector<1x128xf32>
    %303 = arith.addf %296, %302 : vector<1x128xf32>
    %304 = arith.subf %154, %159 : vector<1x128xf32>
    %305 = arith.mulf %304, %304 : vector<1x128xf32>
    %306 = arith.subf %155, %160 : vector<1x128xf32>
    %307 = arith.mulf %306, %306 : vector<1x128xf32>
    %308 = arith.addf %305, %307 : vector<1x128xf32>
    %cst_183 = arith.constant 1.000000e+00 : f32
    %309 = vector.broadcast %cst_183 : f32 to vector<1x128xf32>
    %310 = arith.select %11, %156, %309 : vector<1x128xi1>, vector<1x128xf32>
    %311 = math.sqrt %310 : vector<1x128xf32>
    %cst_184 = arith.constant 1.000000e+00 : f32
    %312 = vector.broadcast %cst_184 : f32 to vector<1x128xf32>
    %313 = arith.select %11, %157, %312 : vector<1x128xi1>, vector<1x128xf32>
    %314 = math.sqrt %313 : vector<1x128xf32>
    %315 = math.sqrt %161 : vector<1x128xf32>
    %316 = arith.subf %311, %315 : vector<1x128xf32>
    %317 = arith.mulf %316, %316 : vector<1x128xf32>
    %318 = math.sqrt %162 : vector<1x128xf32>
    %319 = arith.subf %314, %318 : vector<1x128xf32>
    %320 = arith.mulf %319, %319 : vector<1x128xf32>
    %321 = arith.addf %317, %320 : vector<1x128xf32>
    %322 = arith.subf %158, %153 : vector<1x128xf32>
    %323 = arith.mulf %322, %322 : vector<1x128xf32>
    %324 = arith.addf %308, %321 : vector<1x128xf32>
    %cst_185 = arith.constant 5.000000e+00 : f32
    %325 = vector.broadcast %cst_185 : f32 to vector<1x128xf32>
    %326 = arith.mulf %325, %324 : vector<1x128xf32>
    %327 = arith.addf %326, %323 : vector<1x128xf32>
    %328 = arith.addf %327, %303 : vector<1x128xf32>
    %cst_186 = arith.constant 0.000000e+00 : f32
    %329 = vector.broadcast %cst_186 : f32 to vector<1x128xf32>
    %330 = arith.select %11, %328, %329 : vector<1x128xi1>, vector<1x128xf32>
    %cst_187 = arith.constant 0.000000e+00 : f32
    %331 = vector.broadcast %cst_187 : f32 to vector<1x128xf32>
    %332 = arith.select %13, %112, %331 : vector<1x128xi1>, vector<1x128xf32>
    %cst_188 = arith.constant 5.000000e-01 : f32
    %333 = vector.broadcast %cst_188 : f32 to vector<1x128xf32>
    %334 = arith.mulf %333, %332 : vector<1x128xf32>
    %335 = arith.addf %330, %334 : vector<1x128xf32>
    %cst_189 = arith.constant dense<0.000000e+00> : vector<128xf32>
    %336 = vector.multi_reduction <add>, %335, %cst_189 [0] : vector<1x128xf32> to vector<128xf32>
    %337 = vector.shape_cast %336 : vector<128xf32> to vector<1x128xf32>
    %338 = vector.shape_cast %337 : vector<1x128xf32> to vector<1x1x128xf32>
    %c0_190 = arith.constant 0 : index
    %c0_191 = arith.constant 0 : index
    %c0_192 = arith.constant 0 : index
    %339 = vector.load %arg3[%c0_190, %c0_191, %c0_192] : memref<1x1x128xf32, #tpu.memory_space<vmem>>, vector<1x1x128xf32>
    tpu.vector_store %arg3[%c0_190, %c0_191, %c0_192], %338 {strides = array<i32>} : memref<1x1x128xf32, #tpu.memory_space<vmem>>, vector<1x1x128xf32>,
    return
  }
  func.func @transform_0(%arg0: i32) -> (i32, i32, i32) {
    %c0_i32 = arith.constant 0 : i32
    %c0_i32_0 = arith.constant 0 : i32
    %c0_i32_1 = arith.constant 0 : i32
    return %c0_i32, %arg0, %c0_i32_0 : i32, i32, i32
  }
  func.func @transform_1(%arg0: i32) -> (i32, i32, i32) {
    %c0_i32 = arith.constant 0 : i32
    %c0_i32_0 = arith.constant 0 : i32
    %c0_i32_1 = arith.constant 0 : i32
    return %c0_i32, %arg0, %c0_i32_0 : i32, i32, i32
  }
  func.func @transform_2(%arg0: i32) -> (i32, i32, i32) {
    %c0_i32 = arith.constant 0 : i32
    %c0_i32_0 = arith.constant 0 : i32
    %c0_i32_1 = arith.constant 0 : i32
    return %arg0, %c0_i32, %c0_i32_0 : i32, i32, i32
  }
}

</mosaic_0001>

<llo_original>
// kernel: yolo_v1_loss.1
$region0: #{yolo_v1_loss.1}
  #allocation0 [shape = 'u32[]', space=smem, size = 0x4, offset = 0x4, fixed_abs, tag = 'smem constant byte address 0x4 - core index']
  #allocation1 [shape = 'u32[144,128]{1,0:T(1,128)}', space=vmem, size = 0x12000, scoped, tag = 'internal scratch']
  %s0 = inlined_call_operand.vmem [shape: f32[30,1,128], index: 0, kind: input, shape index: {}]
  %s1 = inlined_call_operand.vmem [shape: f32[30,1,128], index: 1, kind: input, shape index: {}]
  %s2 = inlined_call_operand.vmem [shape: f32[1,1,128], index: 2, kind: output, shape index: {}]
  %s3 = sld [smem:[#allocation0]]
  $region18: #{yolo_v1_loss.1} parent=0
    _
  %s5 = ssub.s32 1, %s3
  %s6 = scalar_select 0, %s5, %s3
  // Predicated region
  $region2: #{yolo_v1_loss.1} parent=0 // pred_check
    _
  $region3: #{yolo_v1_loss.1} parent=0 // pred_check_branch
    %8 = sbr.rel (0) target = $region5
  $region4: #{yolo_v1_loss.1} parent=0 // pred_region
    _
  $region5: #{yolo_v1_loss.1} parent=0 // pred_fallthru
    _
  // Predicated region
  $region6: #{yolo_v1_loss.1} parent=0 // pred_check
    _
  $region7: #{yolo_v1_loss.1} parent=0 // pred_check_branch
    %10 = sbr.rel (0) target = $region9
  $region8: #{yolo_v1_loss.1} parent=0 // pred_region
    _
  $region9: #{yolo_v1_loss.1} parent=0 // pred_fallthru
    _
  %v11 = vld [vmem:[%s1] sm:$0x1]
  %s12 = scalar_lea.vmem %s1, 1
  %v13 = vld [vmem:[%s12] sm:$0x1]
  %s14 = scalar_lea.vmem %s1, 2
  %v15 = vld [vmem:[%s14] sm:$0x1]
  %s16 = scalar_lea.vmem %s1, 3
  %v17 = vld [vmem:[%s16] sm:$0x1]
  %s18 = scalar_lea.vmem %s1, 4
  %v19 = vld [vmem:[%s18] sm:$0x1]
  %vm20 = vcmp.gt.f32.partialorder %v19, 0.0
  %vm21 = vcmp.eq.f32.partialorder %v19, 0.0
  %v22 = vmul.f32 %v11, 0.14285715
  %v23 = vmul.f32 %v15, 0.5
  %v24 = vsub.f32 %v22, %v23
  %v25 = vmul.f32 %v13, 0.14285715
  %v26 = vmul.f32 %v17, 0.5
  %v27 = vsub.f32 %v25, %v26
  %v28 = vadd.f32 %v22, %v23
  %v29 = vadd.f32 %v25, %v26
  %v30 = vsub.f32 %v28, %v24
  %v31 = vsub.f32 %v29, %v27
  %v32 = vmul.f32 %v30, %v31
  %v33 = vld [vmem:[%s0] sm:$0x1]
  %s34 = scalar_lea.vmem %s0, 1
  %v35 = vld [vmem:[%s34] sm:$0x1]
  %s36 = scalar_lea.vmem %s0, 2
  %v37 = vld [vmem:[%s36] sm:$0x1]
  %s38 = scalar_lea.vmem %s0, 3
  %v39 = vld [vmem:[%s38] sm:$0x1]
  %s40 = scalar_lea.vmem %s0, 4
  %v41 = vld [vmem:[%s40] sm:$0x1]
  %v42 = vsub.f32 %v41, %v19
  %v43 = vmul.f32 %v42, %v42
  %v44 = vadd.f32 %v43, 0.0
  %v45 = vmul.f32 %v33, 0.14285715
  %v46 = vmul.f32 %v37, 0.5
  %v47 = vsub.f32 %v45, %v46
  %v48 = vmul.f32 %v35, 0.14285715
  %v49 = vmul.f32 %v39, 0.5
  %v50 = vsub.f32 %v48, %v49
  %v51 = vadd.f32 %v45, %v46
  %v52 = vadd.f32 %v48, %v49
  %v53 = vmin.f32 %v51, %v28
  %v54 = vmax.f32 %v47, %v24
  %v55 = vsub.f32 %v53, %v54
  %v56 = vmax.f32 %v55, 0.0
  %v57 = vmin.f32 %v52, %v29
  %v58 = vmax.f32 %v50, %v27
  %v59 = vsub.f32 %v57, %v58
  %v60 = vmax.f32 %v59, 0.0
  %v61 = vmul.f32 %v56, %v60
  %v62 = vsub.f32 %v51, %v47
  %v63 = vsub.f32 %v52, %v50
  %v64 = vmul.f32 %v62, %v63
  %v65 = vadd.f32 %v64, %v32
  %v66 = vsub.f32 %v65, %v61
  %v67 = vadd.f32 %v66, 1e-10
  %v68 = vrcp.pop %v67
  %v69 = vmul.f32 %v61, %v68
  %s70 = scalar_lea.vmem %s1, 5
  %v71 = vld [vmem:[%s70] sm:$0x1]
  %s72 = scalar_lea.vmem %s1, 6
  %v73 = vld [vmem:[%s72] sm:$0x1]
  %s74 = scalar_lea.vmem %s1, 7
  %v75 = vld [vmem:[%s74] sm:$0x1]
  %s76 = scalar_lea.vmem %s1, 8
  %v77 = vld [vmem:[%s76] sm:$0x1]
  %s78 = scalar_lea.vmem %s1, 9
  %v79 = vld [vmem:[%s78] sm:$0x1]
  %s80 = scalar_lea.vmem %s0, 5
  %v81 = vld [vmem:[%s80] sm:$0x1]
  %s82 = scalar_lea.vmem %s0, 6
  %v83 = vld [vmem:[%s82] sm:$0x1]
  %s84 = scalar_lea.vmem %s0, 7
  %v85 = vld [vmem:[%s84] sm:$0x1]
  %s86 = scalar_lea.vmem %s0, 8
  %v87 = vld [vmem:[%s86] sm:$0x1]
  %s88 = scalar_lea.vmem %s0, 9
  %v89 = vld [vmem:[%s88] sm:$0x1]
  %v90 = vsub.f32 %v89, %v79
  %v91 = vmul.f32 %v90, %v90
  %v92 = vadd.f32 %v44, %v91
  %v93 = vmul.f32 %v81, 0.14285715
  %v94 = vmul.f32 %v85, 0.5
  %v95 = vsub.f32 %v93, %v94
  %v96 = vmul.f32 %v83, 0.14285715
  %v97 = vmul.f32 %v87, 0.5
  %v98 = vsub.f32 %v96, %v97
  %v99 = vadd.f32 %v93, %v94
  %v100 = vadd.f32 %v96, %v97
  %v101 = vmin.f32 %v99, %v28
  %v102 = vmax.f32 %v95, %v24
  %v103 = vsub.f32 %v101, %v102
  %v104 = vmax.f32 %v103, 0.0
  %v105 = vmin.f32 %v100, %v29
  %v106 = vmax.f32 %v98, %v27
  %v107 = vsub.f32 %v105, %v106
  %v108 = vmax.f32 %v107, 0.0
  %v109 = vmul.f32 %v104, %v108
  %v110 = vsub.f32 %v99, %v95
  %v111 = vsub.f32 %v100, %v98
  %v112 = vmul.f32 %v110, %v111
  %v113 = vadd.f32 %v112, %v32
  %v114 = vsub.f32 %v113, %v109
  %v115 = vadd.f32 %v114, 1e-10
  %v116 = vrcp.pop %v115
  %v117 = vmul.f32 %v109, %v116
  %vm118 = vcmp.gt.f32.partialorder %v117, %v69
  %v119 = vsel %vm118, %v117, %v69
  %v120 = vsel %vm118, %v81, %v33
  %v121 = vsel %vm118, %v83, %v35
  %v122 = vsel %vm118, %v85, %v37
  %v123 = vsel %vm118, %v87, %v39
  %v124 = vsel %vm118, %v89, %v41
  %v125 = vsel %vm118, %v71, %v11
  %v126 = vsel %vm118, %v73, %v13
  %v127 = vsel %vm118, %v75, %v15
  %v128 = vsel %vm118, %v77, %v17
  %s129 = scalar_lea.vmem %s0, 10
  %v130 = vld [vmem:[%s129] sm:$0x1]
  %s131 = scalar_lea.vmem %s1, 10
  %v132 = vld [vmem:[%s131] sm:$0x1]
  %v133 = vsub.f32 %v130, %v132
  %v134 = vmul.f32 %v133, %v133
  %v135 = vadd.f32 %v134, 0.0
  %s136 = scalar_lea.vmem %s0, 11
  %v137 = vld [vmem:[%s136] sm:$0x1]
  %s138 = scalar_lea.vmem %s1, 11
  %v139 = vld [vmem:[%s138] sm:$0x1]
  %v140 = vsub.f32 %v137, %v139
  %v141 = vmul.f32 %v140, %v140
  %v142 = vadd.f32 %v135, %v141
  %s143 = scalar_lea.vmem %s0, 12
  %v144 = vld [vmem:[%s143] sm:$0x1]
  %s145 = scalar_lea.vmem %s1, 12
  %v146 = vld [vmem:[%s145] sm:$0x1]
  %v147 = vsub.f32 %v144, %v146
  %v148 = vmul.f32 %v147, %v147
  %v149 = vadd.f32 %v142, %v148
  %s150 = scalar_lea.vmem %s0, 13
  %v151 = vld [vmem:[%s150] sm:$0x1]
  %s152 = scalar_lea.vmem %s1, 13
  %v153 = vld [vmem:[%s152] sm:$0x1]
  %v154 = vsub.f32 %v151, %v153
  %v155 = vmul.f32 %v154, %v154
  %v156 = vadd.f32 %v149, %v155
  %s157 = scalar_lea.vmem %s0, 14
  %v158 = vld [vmem:[%s157] sm:$0x1]
  %s159 = scalar_lea.vmem %s1, 14
  %v160 = vld [vmem:[%s159] sm:$0x1]
  %v161 = vsub.f32 %v158, %v160
  %v162 = vmul.f32 %v161, %v161
  %v163 = vadd.f32 %v156, %v162
  %s164 = scalar_lea.vmem %s0, 15
  %v165 = vld [vmem:[%s164] sm:$0x1]
  %s166 = scalar_lea.vmem %s1, 15
  %v167 = vld [vmem:[%s166] sm:$0x1]
  %v168 = vsub.f32 %v165, %v167
  %v169 = vmul.f32 %v168, %v168
  %v170 = vadd.f32 %v163, %v169
  %s171 = scalar_lea.vmem %s0, 16
  %v172 = vld [vmem:[%s171] sm:$0x1]
  %s173 = scalar_lea.vmem %s1, 16
  %v174 = vld [vmem:[%s173] sm:$0x1]
  %v175 = vsub.f32 %v172, %v174
  %v176 = vmul.f32 %v175, %v175
  %v177 = vadd.f32 %v170, %v176
  %s178 = scalar_lea.vmem %s0, 17
  %v179 = vld [vmem:[%s178] sm:$0x1]
  %s180 = scalar_lea.vmem %s1, 17
  %v181 = vld [vmem:[%s180] sm:$0x1]
  %v182 = vsub.f32 %v179, %v181
  %v183 = vmul.f32 %v182, %v182
  %v184 = vadd.f32 %v177, %v183
  %s185 = scalar_lea.vmem %s0, 18
  %v186 = vld [vmem:[%s185] sm:$0x1]
  %s187 = scalar_lea.vmem %s1, 18
  %v188 = vld [vmem:[%s187] sm:$0x1]
  %v189 = vsub.f32 %v186, %v188
  %v190 = vmul.f32 %v189, %v189
  %v191 = vadd.f32 %v184, %v190
  %s192 = scalar_lea.vmem %s0, 19
  %v193 = vld [vmem:[%s192] sm:$0x1]
  %s194 = scalar_lea.vmem %s1, 19
  %v195 = vld [vmem:[%s194] sm:$0x1]
  %v196 = vsub.f32 %v193, %v195
  %v197 = vmul.f32 %v196, %v196
  %v198 = vadd.f32 %v191, %v197
  %s199 = scalar_lea.vmem %s0, 20
  %v200 = vld [vmem:[%s199] sm:$0x1]
  %s201 = scalar_lea.vmem %s1, 20
  %v202 = vld [vmem:[%s201] sm:$0x1]
  %v203 = vsub.f32 %v200, %v202
  %v204 = vmul.f32 %v203, %v203
  %v205 = vadd.f32 %v198, %v204
  %s206 = scalar_lea.vmem %s0, 21
  %v207 = vld [vmem:[%s206] sm:$0x1]
  %s208 = scalar_lea.vmem %s1, 21
  %v209 = vld [vmem:[%s208] sm:$0x1]
  %v210 = vsub.f32 %v207, %v209
  %v211 = vmul.f32 %v210, %v210
  %v212 = vadd.f32 %v205, %v211
  %s213 = scalar_lea.vmem %s0, 22
  %v214 = vld [vmem:[%s213] sm:$0x1]
  %s215 = scalar_lea.vmem %s1, 22
  %v216 = vld [vmem:[%s215] sm:$0x1]
  %v217 = vsub.f32 %v214, %v216
  %v218 = vmul.f32 %v217, %v217
  %v219 = vadd.f32 %v212, %v218
  %s220 = scalar_lea.vmem %s0, 23
  %v221 = vld [vmem:[%s220] sm:$0x1]
  %s222 = scalar_lea.vmem %s1, 23
  %v223 = vld [vmem:[%s222] sm:$0x1]
  %v224 = vsub.f32 %v221, %v223
  %v225 = vmul.f32 %v224, %v224
  %v226 = vadd.f32 %v219, %v225
  %s227 = scalar_lea.vmem %s0, 24
  %v228 = vld [vmem:[%s227] sm:$0x1]
  %s229 = scalar_lea.vmem %s1, 24
  %v230 = vld [vmem:[%s229] sm:$0x1]
  %v231 = vsub.f32 %v228, %v230
  %v232 = vmul.f32 %v231, %v231
  %v233 = vadd.f32 %v226, %v232
  %s234 = scalar_lea.vmem %s0, 25
  %v235 = vld [vmem:[%s234] sm:$0x1]
  %s236 = scalar_lea.vmem %s1, 25
  %v237 = vld [vmem:[%s236] sm:$0x1]
  %v238 = vsub.f32 %v235, %v237
  %v239 = vmul.f32 %v238, %v238
  %v240 = vadd.f32 %v233, %v239
  %s241 = scalar_lea.vmem %s0, 26
  %v242 = vld [vmem:[%s241] sm:$0x1]
  %s243 = scalar_lea.vmem %s1, 26
  %v244 = vld [vmem:[%s243] sm:$0x1]
  %v245 = vsub.f32 %v242, %v244
  %v246 = vmul.f32 %v245, %v245
  %v247 = vadd.f32 %v240, %v246
  %s248 = scalar_lea.vmem %s0, 27
  %v249 = vld [vmem:[%s248] sm:$0x1]
  %s250 = scalar_lea.vmem %s1, 27
  %v251 = vld [vmem:[%s250] sm:$0x1]
  %v252 = vsub.f32 %v249, %v251
  %v253 = vmul.f32 %v252, %v252
  %v254 = vadd.f32 %v247, %v253
  %s255 = scalar_lea.vmem %s0, 28
  %v256 = vld [vmem:[%s255] sm:$0x1]
  %s257 = scalar_lea.vmem %s1, 28
  %v258 = vld [vmem:[%s257] sm:$0x1]
  %v259 = vsub.f32 %v256, %v258
  %v260 = vmul.f32 %v259, %v259
  %v261 = vadd.f32 %v254, %v260
  %s262 = scalar_lea.vmem %s0, 29
  %v263 = vld [vmem:[%s262] sm:$0x1]
  %s264 = scalar_lea.vmem %s1, 29
  %v265 = vld [vmem:[%s264] sm:$0x1]
  %v266 = vsub.f32 %v263, %v265
  %v267 = vmul.f32 %v266, %v266
  %v268 = vadd.f32 %v261, %v267
  %v269 = vsub.f32 %v120, %v125
  %v270 = vmul.f32 %v269, %v269
  %v271 = vsub.f32 %v121, %v126
  %v272 = vmul.f32 %v271, %v271
  %v273 = vadd.f32 %v270, %v272
  %v274 = vsel %vm20, %v122, 1.0
  %v275 = vrsqrt.pop %v274
  %v276 = vmul.f32 %v274, %v275
  %vm277 = vcmp.eq.f32.partialorder %v274, inf
  %v278 = vsel %vm277, %v274, %v276
  %vm279 = vcmp.eq.f32.partialorder %v274, 0.0
  %v280 = vand.u32 %v274, 2147483648
  %v281 = vsel %vm279, %v280, %v278
  %v282 = vsel %vm20, %v123, 1.0
  %v283 = vrsqrt.pop %v282
  %v284 = vmul.f32 %v282, %v283
  %vm285 = vcmp.eq.f32.partialorder %v282, inf
  %v286 = vsel %vm285, %v282, %v284
  %vm287 = vcmp.eq.f32.partialorder %v282, 0.0
  %v288 = vand.u32 %v282, 2147483648
  %v289 = vsel %vm287, %v288, %v286
  %v290 = vrsqrt.pop %v127
  %v291 = vmul.f32 %v127, %v290
  %vm292 = vcmp.eq.f32.partialorder %v127, inf
  %v293 = vsel %vm292, %v127, %v291
  %vm294 = vcmp.eq.f32.partialorder %v127, 0.0
  %v295 = vand.u32 %v127, 2147483648
  %v296 = vsel %vm294, %v295, %v293
  %v297 = vsub.f32 %v281, %v296
  %v298 = vmul.f32 %v297, %v297
  %v299 = vrsqrt.pop %v128
  %v300 = vmul.f32 %v128, %v299
  %vm301 = vcmp.eq.f32.partialorder %v128, inf
  %v302 = vsel %vm301, %v128, %v300
  %vm303 = vcmp.eq.f32.partialorder %v128, 0.0
  %v304 = vand.u32 %v128, 2147483648
  %v305 = vsel %vm303, %v304, %v302
  %v306 = vsub.f32 %v289, %v305
  %v307 = vmul.f32 %v306, %v306
  %v308 = vadd.f32 %v298, %v307
  %v309 = vsub.f32 %v124, %v119
  %v310 = vmul.f32 %v309, %v309
  %v311 = vadd.f32 %v273, %v308
  %v312 = vmul.f32 %v311, 5.0
  %v313 = vadd.f32 %v312, %v310
  %v314 = vadd.f32 %v313, %v268
  %v315 = vsel %vm20, %v314, 0.0
  %v316 = vsel %vm21, %v92, 0.0
  %v317 = vmul.f32 %v316, 0.5
  %v318 = vadd.f32 %v315, %v317
  %v319 = vadd.f32 %v318, 0.0
  %320 = vst [vmem:[%s2] sm:$0x1] %v319
  // Predicated region
  $region10: #{yolo_v1_loss.1} parent=0 // pred_check
    _
  $region11: #{yolo_v1_loss.1} parent=0 // pred_check_branch
    %322 = sbr.rel (0) target = $region13
  $region12: #{yolo_v1_loss.1} parent=0 // pred_region
    _
  $region13: #{yolo_v1_loss.1} parent=0 // pred_fallthru
    _
  // Predicated region
  $region14: #{yolo_v1_loss.1} parent=0 // pred_check
    _
  $region15: #{yolo_v1_loss.1} parent=0 // pred_check_branch
    %324 = sbr.rel (0) target = $region17
  $region16: #{yolo_v1_loss.1} parent=0 // pred_region
    _
  $region17: #{yolo_v1_loss.1} parent=0 // pred_fallthru
    _

</llo_original>
